<compile_context>
chip_gen: v7x
topology: tpu7x:2x2x1
jax: 0.10.0
libtpu: 0.0.40
codegen_flags: <defaults>
</compile_context>

<pallas_src>
import functools
import math

import jax
import jax.numpy as jnp
from jax import lax
from jax.experimental import pallas as pl
from jax.experimental.pallas import tpu as pltpu


# ----------------------------------------------------------------------------
# Kernel 1: K / V projections, tiled over sequence rows, bf16 outputs.
# ----------------------------------------------------------------------------
def kv_proj_kernel(x_ref, wk_ref, bk_ref, wv_ref, bv_ref, k_ref, v_ref):
    xb = x_ref[...].astype(jnp.bfloat16)                          # [TQ, D]
    k = jnp.dot(xb, wk_ref[...], preferred_element_type=jnp.float32) + bk_ref[...]
    v = jnp.dot(xb, wv_ref[...], preferred_element_type=jnp.float32) + bv_ref[...]
    k_ref[...] = k.astype(k_ref.dtype)
    v_ref[...] = v.astype(v_ref.dtype)


# ----------------------------------------------------------------------------
# Kernel 2: Q-proj + attention + output projection + LN1 + FFN + LN2, tiled
# over query rows; K/V (full padded sequence, bf16) and all weights are
# VMEM-resident via constant index_maps.
# ----------------------------------------------------------------------------
def attn_ffn_kernel(x_ref, k_ref, v_ref,
                    wq_ref, bq_ref, wo_ref, bo_ref,
                    g1_ref, be1_ref, g2_ref, be2_ref,
                    w1_ref, bf1_ref, w2_ref, bf2_ref,
                    out_ref, attn_ref, *, seq_len):
    eps = 1e-5
    x = x_ref[...]                                                # [TQ, D] f32
    d_model = x.shape[-1]
    inv_sqrt_d = 1.0 / math.sqrt(d_model)
    inv_d = 1.0 / d_model

    xb = x.astype(jnp.bfloat16)

    # ---- Q computed in-kernel; fold 1/sqrt(d) into the Q tile -------------
    q = jnp.dot(xb, wq_ref[...], preferred_element_type=jnp.float32) + bq_ref[...]
    qs = (q * inv_sqrt_d).astype(jnp.bfloat16)                    # [TQ, D]

    # scores = (q k^T)/sqrt(d): contract last dims -> no k.T XLU transpose.
    scores = lax.dot_general(
        qs, k_ref[...], dimension_numbers=(((1,), (1,)), ((), ())),
        preferred_element_type=jnp.float32)                       # [TQ, S_pad] f32

    s_pad = k_ref.shape[0]
    if seq_len < s_pad:                                           # static branch
        col = lax.broadcasted_iota(jnp.int32, scores.shape, 1)
        scores = jnp.where(col < seq_len, scores, -1e30)          # mask pad keys

    # ---- softmax (f32, denom via EUP approx reciprocal) --------------------
    m = jnp.max(scores, axis=-1, keepdims=True)
    e = jnp.exp(scores - m)
    denom = jnp.sum(e, axis=-1, keepdims=True)
    attn = (e * pl.reciprocal(denom, approx=True)).astype(jnp.bfloat16)
    attn_ref[...] = attn.astype(attn_ref.dtype)

    attn_out = jnp.dot(attn, v_ref[...],
                       preferred_element_type=jnp.float32)        # [TQ, D] f32

    # ---- output projection + residual + LayerNorm1 (two-pass variance) ----
    proj = jnp.dot(attn_out.astype(jnp.bfloat16), wo_ref[...],
                   preferred_element_type=jnp.float32) + bo_ref[...]
    # TODO(synk): Dropout(p=0.1) treated as identity (eval-mode semantics).
    h = x + proj
    mu = jnp.sum(h, axis=-1, keepdims=True) * inv_d
    c = h - mu
    var = jnp.sum(c * c, axis=-1, keepdims=True) * inv_d
    x1 = c * lax.rsqrt(var + eps) * g1_ref[...] + be1_ref[...]

    # ---- FFN: Linear -> ReLU -> Linear (bf16 operands, f32 accumulate) ----
    hid = jnp.dot(x1.astype(jnp.bfloat16), w1_ref[...],
                  preferred_element_type=jnp.float32) + bf1_ref[...]
    hid = jnp.maximum(hid, 0.0)
    ffn = jnp.dot(hid.astype(jnp.bfloat16), w2_ref[...],
                  preferred_element_type=jnp.float32) + bf2_ref[...]

    # ---- residual + LayerNorm2 (two-pass variance) -------------------------
    h2 = x1 + ffn
    mu2 = jnp.sum(h2, axis=-1, keepdims=True) * inv_d
    c2 = h2 - mu2
    var2 = jnp.sum(c2 * c2, axis=-1, keepdims=True) * inv_d
    out = c2 * lax.rsqrt(var2 + eps) * g2_ref[...] + be2_ref[...]
    out_ref[...] = out.astype(out_ref.dtype)


# ----------------------------------------------------------------------------
# Wrapper
# ----------------------------------------------------------------------------
def _round_up(x, m):
    return ((x + m - 1) // m) * m


def _choose_tile(seq):
    """MXU-aligned query tile: 128 on v5e (4x128^2 MXU), 256 on v6e/v7x."""
    kind = jax.devices()[0].device_kind.lower()
    target = 128 if "v5" in kind else 256
    if seq <= target:
        return _round_up(seq, 8)
    return target


def _const_spec(shape):
    zeros = (0,) * len(shape)
    # TODO(synk): single-buffer constant operands (pipeline_mode=pl.Buffered(1))
    # once the installed Mosaic is verified to accept buffer_count=1 here.
    return pl.BlockSpec(shape, lambda i, _z=zeros: _z)


def transformer_layer(x, params, attn_dtype=jnp.bfloat16):
    """x: [seq, d_model] float32. params: dict of weights (see init_params)."""
    S, D = x.shape
    Dff = params["w1"].shape[1]
    TQ = _choose_tile(S)
    S_pad = _round_up(S, TQ)
    grid = (S_pad // TQ,)

    x_p = jnp.pad(x, ((0, S_pad - S), (0, 0))) if S_pad != S else x

    bf = lambda w: w.astype(jnp.bfloat16)   # bf16 matmul operands, f32 accum
    row_spec = pl.BlockSpec((TQ, D), lambda i: (i, 0))
    cparams_kv = pltpu.CompilerParams(dimension_semantics=("parallel",))

    # ---- Stage 1: K/V projections (row-tiled, bf16 outputs) ----
    k, v = pl.pallas_call(
        kv_proj_kernel,
        out_shape=(jax.ShapeDtypeStruct((S_pad, D), jnp.bfloat16),) * 2,
        grid=grid,
        in_specs=[
            row_spec,
            _const_spec((D, D)), _const_spec((1, D)),
            _const_spec((D, D)), _const_spec((1, D)),
        ],
        out_specs=(pl.BlockSpec((TQ, D), lambda i: (i, 0)),
                   pl.BlockSpec((TQ, D), lambda i: (i, 0))),
        compiler_params=cparams_kv,
    )(x_p, bf(params["wk"]), params["bk"], bf(params["wv"]), params["bv"])

    # ---- Stage 2: Q-proj + attention + LN1 + FFN + LN2 (query-tiled) ----
    attn_bytes = jnp.dtype(attn_dtype).itemsize
    # VMEM budget: double-buffered bf16 constants (wq, wo, w1, w2, K, V),
    # double-buffered x/out/attn tiles, plus in-kernel temporaries.
    resident = 2 * 2 * (2 * D * D + 2 * D * Dff + 2 * S_pad * D)
    tiles = 2 * (2 * TQ * D * 4 + TQ * S_pad * attn_bytes)
    temps = TQ * S_pad * 8 + TQ * Dff * 8 + TQ * D * 32
    vmem_limit = int(min(64 * 2 ** 20,
                         max(2 * (resident + tiles + temps) + (1 << 20),
                             16 * 2 ** 20)))
    cparams_attn = pltpu.CompilerParams(dimension_semantics=("parallel",),
                                        vmem_limit_bytes=vmem_limit)

    flops = (2 * S_pad * D * D * 2          # q-proj + out-proj
             + 2 * S_pad * S_pad * D * 2    # scores + attn@v
             + 2 * S_pad * D * Dff * 2)     # FFN
    transcendentals = S_pad * S_pad + 3 * S_pad
    bytes_accessed = (4 * 2 * S_pad * D + 2 * 2 * S_pad * D
                      + attn_bytes * S_pad * S_pad
                      + 2 * (2 * D * D + 2 * D * Dff))
    cost = pl.CostEstimate(flops=int(flops),
                           transcendentals=int(transcendentals),
                           bytes_accessed=int(bytes_accessed))

    out_p, attn_p = pl.pallas_call(
        functools.partial(attn_ffn_kernel, seq_len=S),
        out_shape=(jax.ShapeDtypeStruct((S_pad, D), jnp.float32),
                   jax.ShapeDtypeStruct((S_pad, S_pad), attn_dtype)),
        grid=grid,
        in_specs=[
            row_spec,                                        # x   (query tile)
            _const_spec((S_pad, D)), _const_spec((S_pad, D)),  # k, v (resident bf16)
            _const_spec((D, D)), _const_spec((1, D)),          # wq, bq
            _const_spec((D, D)), _const_spec((1, D)),          # wo, bo
            _const_spec((1, D)), _const_spec((1, D)),          # g1, be1
            _const_spec((1, D)), _const_spec((1, D)),          # g2, be2
            _const_spec((D, Dff)), _const_spec((1, Dff)),      # w1, bf1
            _const_spec((Dff, D)), _const_spec((1, D)),        # w2, bf2
        ],
        out_specs=(pl.BlockSpec((TQ, D), lambda i: (i, 0)),
                   pl.BlockSpec((TQ, S_pad), lambda i: (i, 0))),
        compiler_params=cparams_attn,
        cost_estimate=cost,
    )(x_p, k, v,
      bf(params["wq"]), params["bq"], bf(params["wo"]), params["bo"],
      params["g1"], params["be1"], params["g2"], params["be2"],
      bf(params["w1"]), params["bf1"], bf(params["w2"]), params["bf2"])

    if S_pad != S:
        return out_p[:S], attn_p[:S, :S]
    return out_p, attn_p


# ----------------------------------------------------------------------------
# Params / reference
# ----------------------------------------------------------------------------
def init_params(key, d_model, d_internal):
    """PyTorch-style init. Linear weights stored transposed as [in, out];
    biases / LN params as [1, dim]."""
    ks = jax.random.split(key, 12)

    def linear(kw, kb, fan_in, fan_out):
        bound = 1.0 / math.sqrt(fan_in)
        w = jax.random.uniform(kw, (fan_in, fan_out), jnp.float32, -bound, bound)
        b = jax.random.uniform(kb, (1, fan_out), jnp.float32, -bound, bound)
        return w, b

    wq, bq = linear(ks[0], ks[1], d_model, d_model)
    wk, bk = linear(ks[2], ks[3], d_model, d_model)
    wv, bv = linear(ks[4], ks[5], d_model, d_model)
    wo, bo = linear(ks[6], ks[7], d_model, d_model)
    w1, bf1 = linear(ks[8], ks[9], d_model, d_internal)
    w2, bf2 = linear(ks[10], ks[11], d_internal, d_model)
    return dict(
        wq=wq, bq=bq, wk=wk, bk=bk, wv=wv, bv=bv, wo=wo, bo=bo,
        g1=jnp.ones((1, d_model), jnp.float32), be1=jnp.zeros((1, d_model), jnp.float32),
        g2=jnp.ones((1, d_model), jnp.float32), be2=jnp.zeros((1, d_model), jnp.float32),
        w1=w1, bf1=bf1, w2=w2, bf2=bf2,
    )


def transformer_layer_ref(x, params):
    """Pure-JAX f32 reference (PyTorch semantics, dropout = identity)."""
    eps = 1e-5
    q = x @ params["wq"] + params["bq"]
    k = x @ params["wk"] + params["bk"]
    v = x @ params["wv"] + params["bv"]
    scores = (q @ k.T) / math.sqrt(x.shape[-1])
    attn = jax.nn.softmax(scores, axis=-1)
    proj = (attn @ v) @ params["wo"] + params["bo"]

    def ln(h, g, b):
        mu = jnp.mean(h, axis=-1, keepdims=True)
        var = jnp.mean((h - mu) ** 2, axis=-1, keepdims=True)
        return (h - mu) / jnp.sqrt(var + eps) * g + b

    x1 = ln(x + proj, params["g1"], params["be1"])
    ffn = jnp.maximum(x1 @ params["w1"] + params["bf1"], 0.0) @ params["w2"] + params["bf2"]
    x2 = ln(x1 + ffn, params["g2"], params["be2"])
    return x2, attn


if __name__ == "__main__":
    seq, d_model, d_internal = 8, 32, 64
    key = jax.random.PRNGKey(0)
    kx, kp = jax.random.split(key)
    x = jax.random.normal(kx, (seq, d_model), jnp.float32)
    params = init_params(kp, d_model, d_internal)

    out, attn = jax.jit(transformer_layer)(x, params)
    jax.block_until_ready((out, attn))

    assert out.shape == (seq, d_model) and attn.shape == (seq, seq)
    attn_f32 = attn.astype(jnp.float32)
    # softmax rows sum to 1 (approx reciprocal + bf16 store -> loose tolerance)
    assert jnp.allclose(jnp.sum(attn_f32, axis=-1), 1.0, atol=1e-2)
    # compare against pure-JAX f32 reference (bf16 matmul operands -> loose tol)
    out_ref, attn_ref = transformer_layer_ref(x, params)
    assert jnp.allclose(attn_f32, attn_ref, atol=2e-2)
    assert jnp.allclose(out, out_ref, atol=1e-1)
    print("KERNEL_OK")
</pallas_src>

<mosaic_0001>
module attributes {stable_mosaic.version = 11 : i64} {
  func.func @kv_proj_kernel(%arg0: i32, %arg1: memref<8x32xf32, #tpu.memory_space<vmem>>, %arg2: memref<32x32xbf16, #tpu.memory_space<vmem>>, %arg3: memref<1x32xf32, #tpu.memory_space<vmem>>, %arg4: memref<32x32xbf16, #tpu.memory_space<vmem>>, %arg5: memref<1x32xf32, #tpu.memory_space<vmem>>, %arg6: memref<8x32xbf16, #tpu.memory_space<vmem>>, %arg7: memref<8x32xbf16, #tpu.memory_space<vmem>>) attributes {dimension_semantics = [#tpu.dimension_semantics<parallel>], iteration_bounds = array<i64: 1>, scalar_prefetch = 0 : i64, scratch_operands = 0 : i64, tpu.core_type = #tpu.core_type<tc>, window_params = [{transform_indices = @transform_0, window_bounds = array<i64: 8, 32>}, {pipeline_mode = #tpu.pipeline_mode<synchronous>, transform_indices = @transform_1, window_bounds = array<i64: 32, 32>}, {pipeline_mode = #tpu.pipeline_mode<synchronous>, transform_indices = @transform_2, window_bounds = array<i64: 1, 32>}, {pipeline_mode = #tpu.pipeline_mode<synchronous>, transform_indices = @transform_3, window_bounds = array<i64: 32, 32>}, {pipeline_mode = #tpu.pipeline_mode<synchronous>, transform_indices = @transform_4, window_bounds = array<i64: 1, 32>}, {transform_indices = @transform_5, window_bounds = array<i64: 8, 32>}, {transform_indices = @transform_6, window_bounds = array<i64: 8, 32>}]} {
    %c0 = arith.constant 0 : index
    %c0_0 = arith.constant 0 : index
    %0 = vector.load %arg1[%c0, %c0_0] : memref<8x32xf32, #tpu.memory_space<vmem>>, vector<8x32xf32>
    %1 = arith.truncf %0 : vector<8x32xf32> to vector<8x32xbf16>
    %c0_1 = arith.constant 0 : index
    %c0_2 = arith.constant 0 : index
    %2 = vector.load %arg2[%c0_1, %c0_2] : memref<32x32xbf16, #tpu.memory_space<vmem>>, vector<32x32xbf16>
    %cst = arith.constant dense<0.000000e+00> : vector<8x32xf32>
    %3 = tpu.matmul %1, %2, %cst {dimension_numbers = #tpu.dot_dimension_numbers<[1], [0], [0], [1], [0, 0, 1, 1], [], []>} : vector<8x32xbf16>, vector<32x32xbf16>, vector<8x32xf32> -> vector<8x32xf32>
    %c0_3 = arith.constant 0 : index
    %c0_4 = arith.constant 0 : index
    %4 = vector.load %arg3[%c0_3, %c0_4] : memref<1x32xf32, #tpu.memory_space<vmem>>, vector<1x32xf32>
    %5 = vector.broadcast %4 : vector<1x32xf32> to vector<8x32xf32>
    %6 = arith.addf %3, %5 : vector<8x32xf32>
    %c0_5 = arith.constant 0 : index
    %c0_6 = arith.constant 0 : index
    %7 = vector.load %arg4[%c0_5, %c0_6] : memref<32x32xbf16, #tpu.memory_space<vmem>>, vector<32x32xbf16>
    %cst_7 = arith.constant dense<0.000000e+00> : vector<8x32xf32>
    %8 = tpu.matmul %1, %7, %cst_7 {dimension_numbers = #tpu.dot_dimension_numbers<[1], [0], [0], [1], [0, 0, 1, 1], [], []>} : vector<8x32xbf16>, vector<32x32xbf16>, vector<8x32xf32> -> vector<8x32xf32>
    %c0_8 = arith.constant 0 : index
    %c0_9 = arith.constant 0 : index
    %9 = vector.load %arg5[%c0_8, %c0_9] : memref<1x32xf32, #tpu.memory_space<vmem>>, vector<1x32xf32>
    %10 = vector.broadcast %9 : vector<1x32xf32> to vector<8x32xf32>
    %11 = arith.addf %8, %10 : vector<8x32xf32>
    %12 = arith.truncf %6 : vector<8x32xf32> to vector<8x32xbf16>
    %c0_10 = arith.constant 0 : index
    %c0_11 = arith.constant 0 : index
    %13 = vector.load %arg6[%c0_10, %c0_11] : memref<8x32xbf16, #tpu.memory_space<vmem>>, vector<8x32xbf16>
    tpu.vector_store %arg6[%c0_10, %c0_11], %12 {strides = array<i32>} : memref<8x32xbf16, #tpu.memory_space<vmem>>, vector<8x32xbf16>,
    %14 = arith.truncf %11 : vector<8x32xf32> to vector<8x32xbf16>
    %c0_12 = arith.constant 0 : index
    %c0_13 = arith.constant 0 : index
    %15 = vector.load %arg7[%c0_12, %c0_13] : memref<8x32xbf16, #tpu.memory_space<vmem>>, vector<8x32xbf16>
    tpu.vector_store %arg7[%c0_12, %c0_13], %14 {strides = array<i32>} : memref<8x32xbf16, #tpu.memory_space<vmem>>, vector<8x32xbf16>,
    return
  }
  func.func @transform_0(%arg0: i32) -> (i32, i32) {
    %c0_i32 = arith.constant 0 : i32
    %c0_i32_0 = arith.constant 0 : i32
    return %arg0, %c0_i32 : i32, i32
  }
  func.func @transform_1(%arg0: i32) -> (i32, i32) {
    %c0_i32 = arith.constant 0 : i32
    %c0_i32_0 = arith.constant 0 : i32
    %c0_i32_1 = arith.constant 0 : i32
    return %c0_i32, %c0_i32_0 : i32, i32
  }
  func.func @transform_2(%arg0: i32) -> (i32, i32) {
    %c0_i32 = arith.constant 0 : i32
    %c0_i32_0 = arith.constant 0 : i32
    %c0_i32_1 = arith.constant 0 : i32
    return %c0_i32, %c0_i32_0 : i32, i32
  }
  func.func @transform_3(%arg0: i32) -> (i32, i32) {
    %c0_i32 = arith.constant 0 : i32
    %c0_i32_0 = arith.constant 0 : i32
    %c0_i32_1 = arith.constant 0 : i32
    return %c0_i32, %c0_i32_0 : i32, i32
  }
  func.func @transform_4(%arg0: i32) -> (i32, i32) {
    %c0_i32 = arith.constant 0 : i32
    %c0_i32_0 = arith.constant 0 : i32
    %c0_i32_1 = arith.constant 0 : i32
    return %c0_i32, %c0_i32_0 : i32, i32
  }
  func.func @transform_5(%arg0: i32) -> (i32, i32) {
    %c0_i32 = arith.constant 0 : i32
    %c0_i32_0 = arith.constant 0 : i32
    return %arg0, %c0_i32 : i32, i32
  }
  func.func @transform_6(%arg0: i32) -> (i32, i32) {
    %c0_i32 = arith.constant 0 : i32
    %c0_i32_0 = arith.constant 0 : i32
    return %arg0, %c0_i32 : i32, i32
  }
}

module attributes {stable_mosaic.version = 11 : i64} {
  func.func @attn_ffn_kernel(%arg0: i32, %arg1: memref<8x32xf32, #tpu.memory_space<vmem>>, %arg2: memref<8x32xbf16, #tpu.memory_space<vmem>>, %arg3: memref<8x32xbf16, #tpu.memory_space<vmem>>, %arg4: memref<32x32xbf16, #tpu.memory_space<vmem>>, %arg5: memref<1x32xf32, #tpu.memory_space<vmem>>, %arg6: memref<32x32xbf16, #tpu.memory_space<vmem>>, %arg7: memref<1x32xf32, #tpu.memory_space<vmem>>, %arg8: memref<1x32xf32, #tpu.memory_space<vmem>>, %arg9: memref<1x32xf32, #tpu.memory_space<vmem>>, %arg10: memref<1x32xf32, #tpu.memory_space<vmem>>, %arg11: memref<1x32xf32, #tpu.memory_space<vmem>>, %arg12: memref<32x64xbf16, #tpu.memory_space<vmem>>, %arg13: memref<1x64xf32, #tpu.memory_space<vmem>>, %arg14: memref<64x32xbf16, #tpu.memory_space<vmem>>, %arg15: memref<1x32xf32, #tpu.memory_space<vmem>>, %arg16: memref<8x32xf32, #tpu.memory_space<vmem>>, %arg17: memref<8x8xbf16, #tpu.memory_space<vmem>>) attributes {dimension_semantics = [#tpu.dimension_semantics<parallel>], iteration_bounds = array<i64: 1>, scalar_prefetch = 0 : i64, scratch_operands = 0 : i64, tpu.core_type = #tpu.core_type<tc>, window_params = [{transform_indices = @transform_0, window_bounds = array<i64: 8, 32>}, {pipeline_mode = #tpu.pipeline_mode<synchronous>, transform_indices = @transform_1, window_bounds = array<i64: 8, 32>}, {pipeline_mode = #tpu.pipeline_mode<synchronous>, transform_indices = @transform_2, window_bounds = array<i64: 8, 32>}, {pipeline_mode = #tpu.pipeline_mode<synchronous>, transform_indices = @transform_3, window_bounds = array<i64: 32, 32>}, {pipeline_mode = #tpu.pipeline_mode<synchronous>, transform_indices = @transform_4, window_bounds = array<i64: 1, 32>}, {pipeline_mode = #tpu.pipeline_mode<synchronous>, transform_indices = @transform_5, window_bounds = array<i64: 32, 32>}, {pipeline_mode = #tpu.pipeline_mode<synchronous>, transform_indices = @transform_6, window_bounds = array<i64: 1, 32>}, {pipeline_mode = #tpu.pipeline_mode<synchronous>, transform_indices = @transform_7, window_bounds = array<i64: 1, 32>}, {pipeline_mode = #tpu.pipeline_mode<synchronous>, transform_indices = @transform_8, window_bounds = array<i64: 1, 32>}, {pipeline_mode = #tpu.pipeline_mode<synchronous>, transform_indices = @transform_9, window_bounds = array<i64: 1, 32>}, {pipeline_mode = #tpu.pipeline_mode<synchronous>, transform_indices = @transform_10, window_bounds = array<i64: 1, 32>}, {pipeline_mode = #tpu.pipeline_mode<synchronous>, transform_indices = @transform_11, window_bounds = array<i64: 32, 64>}, {pipeline_mode = #tpu.pipeline_mode<synchronous>, transform_indices = @transform_12, window_bounds = array<i64: 1, 64>}, {pipeline_mode = #tpu.pipeline_mode<synchronous>, transform_indices = @transform_13, window_bounds = array<i64: 64, 32>}, {pipeline_mode = #tpu.pipeline_mode<synchronous>, transform_indices = @transform_14, window_bounds = array<i64: 1, 32>}, {transform_indices = @transform_15, window_bounds = array<i64: 8, 32>}, {transform_indices = @transform_16, window_bounds = array<i64: 8, 8>}]} {
    %c0 = arith.constant 0 : index
    %c0_0 = arith.constant 0 : index
    %0 = vector.load %arg1[%c0, %c0_0] : memref<8x32xf32, #tpu.memory_space<vmem>>, vector<8x32xf32>
    %1 = arith.truncf %0 : vector<8x32xf32> to vector<8x32xbf16>
    %c0_1 = arith.constant 0 : index
    %c0_2 = arith.constant 0 : index
    %2 = vector.load %arg4[%c0_1, %c0_2] : memref<32x32xbf16, #tpu.memory_space<vmem>>, vector<32x32xbf16>
    %cst = arith.constant dense<0.000000e+00> : vector<8x32xf32>
    %3 = tpu.matmul %1, %2, %cst {dimension_numbers = #tpu.dot_dimension_numbers<[1], [0], [0], [1], [0, 0, 1, 1], [], []>} : vector<8x32xbf16>, vector<32x32xbf16>, vector<8x32xf32> -> vector<8x32xf32>
    %c0_3 = arith.constant 0 : index
    %c0_4 = arith.constant 0 : index
    %4 = vector.load %arg5[%c0_3, %c0_4] : memref<1x32xf32, #tpu.memory_space<vmem>>, vector<1x32xf32>
    %5 = vector.broadcast %4 : vector<1x32xf32> to vector<8x32xf32>
    %6 = arith.addf %3, %5 : vector<8x32xf32>
    %cst_5 = arith.constant 0.176776692 : f32
    %7 = vector.broadcast %cst_5 : f32 to vector<8x32xf32>
    %8 = arith.mulf %6, %7 : vector<8x32xf32>
    %9 = arith.truncf %8 : vector<8x32xf32> to vector<8x32xbf16>
    %c0_6 = arith.constant 0 : index
    %c0_7 = arith.constant 0 : index
    %10 = vector.load %arg2[%c0_6, %c0_7] : memref<8x32xbf16, #tpu.memory_space<vmem>>, vector<8x32xbf16>
    %cst_8 = arith.constant dense<0.000000e+00> : vector<8x8xf32>
    %11 = tpu.matmul %9, %10, %cst_8 {dimension_numbers = #tpu.dot_dimension_numbers<[1], [1], [0], [0], [0, 0, 1, 0], [], []>} : vector<8x32xbf16>, vector<8x32xbf16>, vector<8x8xf32> -> vector<8x8xf32>
    %cst_9 = arith.constant dense<0xFF800000> : vector<8xf32>
    %12 = vector.multi_reduction <maximumf>, %11, %cst_9 [1] : vector<8x8xf32> to vector<8xf32>
    %13 = vector.shape_cast %12 : vector<8xf32> to vector<8x1xf32>
    %14 = vector.broadcast %13 : vector<8x1xf32> to vector<8x8xf32>
    %15 = arith.subf %11, %14 : vector<8x8xf32>
    %16 = math.exp %15 : vector<8x8xf32>
    %cst_10 = arith.constant dense<0.000000e+00> : vector<8xf32>
    %17 = vector.multi_reduction <add>, %16, %cst_10 [1] : vector<8x8xf32> to vector<8xf32>
    %18 = vector.shape_cast %17 : vector<8xf32> to vector<8x1xf32>
    %19 = tpu.reciprocal %18 {approx = true} : vector<8x1xf32> -> vector<8x1xf32>
    %20 = vector.broadcast %19 : vector<8x1xf32> to vector<8x8xf32>
    %21 = arith.mulf %16, %20 : vector<8x8xf32>
    %22 = arith.truncf %21 : vector<8x8xf32> to vector<8x8xbf16>
    %c0_11 = arith.constant 0 : index
    %c0_12 = arith.constant 0 : index
    %23 = vector.load %arg17[%c0_11, %c0_12] : memref<8x8xbf16, #tpu.memory_space<vmem>>, vector<8x8xbf16>
    tpu.vector_store %arg17[%c0_11, %c0_12], %22 {strides = array<i32>} : memref<8x8xbf16, #tpu.memory_space<vmem>>, vector<8x8xbf16>,
    %c0_13 = arith.constant 0 : index
    %c0_14 = arith.constant 0 : index
    %24 = vector.load %arg3[%c0_13, %c0_14] : memref<8x32xbf16, #tpu.memory_space<vmem>>, vector<8x32xbf16>
    %cst_15 = arith.constant dense<0.000000e+00> : vector<8x32xf32>
    %25 = tpu.matmul %22, %24, %cst_15 {dimension_numbers = #tpu.dot_dimension_numbers<[1], [0], [0], [1], [0, 0, 1, 1], [], []>} : vector<8x8xbf16>, vector<8x32xbf16>, vector<8x32xf32> -> vector<8x32xf32>
    %26 = arith.truncf %25 : vector<8x32xf32> to vector<8x32xbf16>
    %c0_16 = arith.constant 0 : index
    %c0_17 = arith.constant 0 : index
    %27 = vector.load %arg6[%c0_16, %c0_17] : memref<32x32xbf16, #tpu.memory_space<vmem>>, vector<32x32xbf16>
    %cst_18 = arith.constant dense<0.000000e+00> : vector<8x32xf32>
    %28 = tpu.matmul %26, %27, %cst_18 {dimension_numbers = #tpu.dot_dimension_numbers<[1], [0], [0], [1], [0, 0, 1, 1], [], []>} : vector<8x32xbf16>, vector<32x32xbf16>, vector<8x32xf32> -> vector<8x32xf32>
    %c0_19 = arith.constant 0 : index
    %c0_20 = arith.constant 0 : index
    %29 = vector.load %arg7[%c0_19, %c0_20] : memref<1x32xf32, #tpu.memory_space<vmem>>, vector<1x32xf32>
    %30 = vector.broadcast %29 : vector<1x32xf32> to vector<8x32xf32>
    %31 = arith.addf %28, %30 : vector<8x32xf32>
    %32 = arith.addf %0, %31 : vector<8x32xf32>
    %cst_21 = arith.constant dense<0.000000e+00> : vector<8xf32>
    %33 = vector.multi_reduction <add>, %32, %cst_21 [1] : vector<8x32xf32> to vector<8xf32>
    %34 = vector.shape_cast %33 : vector<8xf32> to vector<8x1xf32>
    %cst_22 = arith.constant 3.125000e-02 : f32
    %35 = vector.broadcast %cst_22 : f32 to vector<8x1xf32>
    %36 = arith.mulf %34, %35 : vector<8x1xf32>
    %37 = vector.broadcast %36 : vector<8x1xf32> to vector<8x32xf32>
    %38 = arith.subf %32, %37 : vector<8x32xf32>
    %39 = arith.mulf %38, %38 : vector<8x32xf32>
    %cst_23 = arith.constant dense<0.000000e+00> : vector<8xf32>
    %40 = vector.multi_reduction <add>, %39, %cst_23 [1] : vector<8x32xf32> to vector<8xf32>
    %41 = vector.shape_cast %40 : vector<8xf32> to vector<8x1xf32>
    %cst_24 = arith.constant 3.125000e-02 : f32
    %42 = vector.broadcast %cst_24 : f32 to vector<8x1xf32>
    %43 = arith.mulf %41, %42 : vector<8x1xf32>
    %cst_25 = arith.constant 9.99999974E-6 : f32
    %44 = vector.broadcast %cst_25 : f32 to vector<8x1xf32>
    %45 = arith.addf %43, %44 : vector<8x1xf32>
    %46 = math.rsqrt %45 : vector<8x1xf32>
    %47 = vector.broadcast %46 : vector<8x1xf32> to vector<8x32xf32>
    %48 = arith.mulf %38, %47 : vector<8x32xf32>
    %c0_26 = arith.constant 0 : index
    %c0_27 = arith.constant 0 : index
    %49 = vector.load %arg8[%c0_26, %c0_27] : memref<1x32xf32, #tpu.memory_space<vmem>>, vector<1x32xf32>
    %50 = vector.broadcast %49 : vector<1x32xf32> to vector<8x32xf32>
    %51 = arith.mulf %48, %50 : vector<8x32xf32>
    %c0_28 = arith.constant 0 : index
    %c0_29 = arith.constant 0 : index
    %52 = vector.load %arg9[%c0_28, %c0_29] : memref<1x32xf32, #tpu.memory_space<vmem>>, vector<1x32xf32>
    %53 = vector.broadcast %52 : vector<1x32xf32> to vector<8x32xf32>
    %54 = arith.addf %51, %53 : vector<8x32xf32>
    %55 = arith.truncf %54 : vector<8x32xf32> to vector<8x32xbf16>
    %c0_30 = arith.constant 0 : index
    %c0_31 = arith.constant 0 : index
    %56 = vector.load %arg12[%c0_30, %c0_31] : memref<32x64xbf16, #tpu.memory_space<vmem>>, vector<32x64xbf16>
    %cst_32 = arith.constant dense<0.000000e+00> : vector<8x64xf32>
    %57 = tpu.matmul %55, %56, %cst_32 {dimension_numbers = #tpu.dot_dimension_numbers<[1], [0], [0], [1], [0, 0, 1, 1], [], []>} : vector<8x32xbf16>, vector<32x64xbf16>, vector<8x64xf32> -> vector<8x64xf32>
    %c0_33 = arith.constant 0 : index
    %c0_34 = arith.constant 0 : index
    %58 = vector.load %arg13[%c0_33, %c0_34] : memref<1x64xf32, #tpu.memory_space<vmem>>, vector<1x64xf32>
    %59 = vector.broadcast %58 : vector<1x64xf32> to vector<8x64xf32>
    %60 = arith.addf %57, %59 : vector<8x64xf32>
    %cst_35 = arith.constant 0.000000e+00 : f32
    %61 = vector.broadcast %cst_35 : f32 to vector<8x64xf32>
    %62 = arith.maximumf %60, %61 : vector<8x64xf32>
    %63 = arith.truncf %62 : vector<8x64xf32> to vector<8x64xbf16>
    %c0_36 = arith.constant 0 : index
    %c0_37 = arith.constant 0 : index
    %64 = vector.load %arg14[%c0_36, %c0_37] : memref<64x32xbf16, #tpu.memory_space<vmem>>, vector<64x32xbf16>
    %cst_38 = arith.constant dense<0.000000e+00> : vector<8x32xf32>
    %65 = tpu.matmul %63, %64, %cst_38 {dimension_numbers = #tpu.dot_dimension_numbers<[1], [0], [0], [1], [0, 0, 1, 1], [], []>} : vector<8x64xbf16>, vector<64x32xbf16>, vector<8x32xf32> -> vector<8x32xf32>
    %c0_39 = arith.constant 0 : index
    %c0_40 = arith.constant 0 : index
    %66 = vector.load %arg15[%c0_39, %c0_40] : memref<1x32xf32, #tpu.memory_space<vmem>>, vector<1x32xf32>
    %67 = vector.broadcast %66 : vector<1x32xf32> to vector<8x32xf32>
    %68 = arith.addf %65, %67 : vector<8x32xf32>
    %69 = arith.addf %54, %68 : vector<8x32xf32>
    %cst_41 = arith.constant dense<0.000000e+00> : vector<8xf32>
    %70 = vector.multi_reduction <add>, %69, %cst_41 [1] : vector<8x32xf32> to vector<8xf32>
    %71 = vector.shape_cast %70 : vector<8xf32> to vector<8x1xf32>
    %cst_42 = arith.constant 3.125000e-02 : f32
    %72 = vector.broadcast %cst_42 : f32 to vector<8x1xf32>
    %73 = arith.mulf %71, %72 : vector<8x1xf32>
    %74 = vector.broadcast %73 : vector<8x1xf32> to vector<8x32xf32>
    %75 = arith.subf %69, %74 : vector<8x32xf32>
    %76 = arith.mulf %75, %75 : vector<8x32xf32>
    %cst_43 = arith.constant dense<0.000000e+00> : vector<8xf32>
    %77 = vector.multi_reduction <add>, %76, %cst_43 [1] : vector<8x32xf32> to vector<8xf32>
    %78 = vector.shape_cast %77 : vector<8xf32> to vector<8x1xf32>
    %cst_44 = arith.constant 3.125000e-02 : f32
    %79 = vector.broadcast %cst_44 : f32 to vector<8x1xf32>
    %80 = arith.mulf %78, %79 : vector<8x1xf32>
    %cst_45 = arith.constant 9.99999974E-6 : f32
    %81 = vector.broadcast %cst_45 : f32 to vector<8x1xf32>
    %82 = arith.addf %80, %81 : vector<8x1xf32>
    %83 = math.rsqrt %82 : vector<8x1xf32>
    %84 = vector.broadcast %83 : vector<8x1xf32> to vector<8x32xf32>
    %85 = arith.mulf %75, %84 : vector<8x32xf32>
    %c0_46 = arith.constant 0 : index
    %c0_47 = arith.constant 0 : index
    %86 = vector.load %arg10[%c0_46, %c0_47] : memref<1x32xf32, #tpu.memory_space<vmem>>, vector<1x32xf32>
    %87 = vector.broadcast %86 : vector<1x32xf32> to vector<8x32xf32>
    %88 = arith.mulf %85, %87 : vector<8x32xf32>
    %c0_48 = arith.constant 0 : index
    %c0_49 = arith.constant 0 : index
    %89 = vector.load %arg11[%c0_48, %c0_49] : memref<1x32xf32, #tpu.memory_space<vmem>>, vector<1x32xf32>
    %90 = vector.broadcast %89 : vector<1x32xf32> to vector<8x32xf32>
    %91 = arith.addf %88, %90 : vector<8x32xf32>
    %c0_50 = arith.constant 0 : index
    %c0_51 = arith.constant 0 : index
    %92 = vector.load %arg16[%c0_50, %c0_51] : memref<8x32xf32, #tpu.memory_space<vmem>>, vector<8x32xf32>
    tpu.vector_store %arg16[%c0_50, %c0_51], %91 {strides = array<i32>} : memref<8x32xf32, #tpu.memory_space<vmem>>, vector<8x32xf32>,
    return
  }
  func.func @transform_0(%arg0: i32) -> (i32, i32) {
    %c0_i32 = arith.constant 0 : i32
    %c0_i32_0 = arith.constant 0 : i32
    return %arg0, %c0_i32 : i32, i32
  }
  func.func @transform_1(%arg0: i32) -> (i32, i32) {
    %c0_i32 = arith.constant 0 : i32
    %c0_i32_0 = arith.constant 0 : i32
    %c0_i32_1 = arith.constant 0 : i32
    return %c0_i32, %c0_i32_0 : i32, i32
  }
  func.func @transform_2(%arg0: i32) -> (i32, i32) {
    %c0_i32 = arith.constant 0 : i32
    %c0_i32_0 = arith.constant 0 : i32
    %c0_i32_1 = arith.constant 0 : i32
    return %c0_i32, %c0_i32_0 : i32, i32
  }
  func.func @transform_3(%arg0: i32) -> (i32, i32) {
    %c0_i32 = arith.constant 0 : i32
    %c0_i32_0 = arith.constant 0 : i32
    %c0_i32_1 = arith.constant 0 : i32
    return %c0_i32, %c0_i32_0 : i32, i32
  }
  func.func @transform_4(%arg0: i32) -> (i32, i32) {
    %c0_i32 = arith.constant 0 : i32
    %c0_i32_0 = arith.constant 0 : i32
    %c0_i32_1 = arith.constant 0 : i32
    return %c0_i32, %c0_i32_0 : i32, i32
  }
  func.func @transform_5(%arg0: i32) -> (i32, i32) {
    %c0_i32 = arith.constant 0 : i32
    %c0_i32_0 = arith.constant 0 : i32
    %c0_i32_1 = arith.constant 0 : i32
    return %c0_i32, %c0_i32_0 : i32, i32
  }
  func.func @transform_6(%arg0: i32) -> (i32, i32) {
    %c0_i32 = arith.constant 0 : i32
    %c0_i32_0 = arith.constant 0 : i32
    %c0_i32_1 = arith.constant 0 : i32
    return %c0_i32, %c0_i32_0 : i32, i32
  }
  func.func @transform_7(%arg0: i32) -> (i32, i32) {
    %c0_i32 = arith.constant 0 : i32
    %c0_i32_0 = arith.constant 0 : i32
    %c0_i32_1 = arith.constant 0 : i32
    return %c0_i32, %c0_i32_0 : i32, i32
  }
  func.func @transform_8(%arg0: i32) -> (i32, i32) {
    %c0_i32 = arith.constant 0 : i32
    %c0_i32_0 = arith.constant 0 : i32
    %c0_i32_1 = arith.constant 0 : i32
    return %c0_i32, %c0_i32_0 : i32, i32
  }
  func.func @transform_9(%arg0: i32) -> (i32, i32) {
    %c0_i32 = arith.constant 0 : i32
    %c0_i32_0 = arith.constant 0 : i32
    %c0_i32_1 = arith.constant 0 : i32
    return %c0_i32, %c0_i32_0 : i32, i32
  }
  func.func @transform_10(%arg0: i32) -> (i32, i32) {
    %c0_i32 = arith.constant 0 : i32
    %c0_i32_0 = arith.constant 0 : i32
    %c0_i32_1 = arith.constant 0 : i32
    return %c0_i32, %c0_i32_0 : i32, i32
  }
  func.func @transform_11(%arg0: i32) -> (i32, i32) {
    %c0_i32 = arith.constant 0 : i32
    %c0_i32_0 = arith.constant 0 : i32
    %c0_i32_1 = arith.constant 0 : i32
    return %c0_i32, %c0_i32_0 : i32, i32
  }
  func.func @transform_12(%arg0: i32) -> (i32, i32) {
    %c0_i32 = arith.constant 0 : i32
    %c0_i32_0 = arith.constant 0 : i32
    %c0_i32_1 = arith.constant 0 : i32
    return %c0_i32, %c0_i32_0 : i32, i32
  }
  func.func @transform_13(%arg0: i32) -> (i32, i32) {
    %c0_i32 = arith.constant 0 : i32
    %c0_i32_0 = arith.constant 0 : i32
    %c0_i32_1 = arith.constant 0 : i32
    return %c0_i32, %c0_i32_0 : i32, i32
  }
  func.func @transform_14(%arg0: i32) -> (i32, i32) {
    %c0_i32 = arith.constant 0 : i32
    %c0_i32_0 = arith.constant 0 : i32
    %c0_i32_1 = arith.constant 0 : i32
    return %c0_i32, %c0_i32_0 : i32, i32
  }
  func.func @transform_15(%arg0: i32) -> (i32, i32) {
    %c0_i32 = arith.constant 0 : i32
    %c0_i32_0 = arith.constant 0 : i32
    return %arg0, %c0_i32 : i32, i32
  }
  func.func @transform_16(%arg0: i32) -> (i32, i32) {
    %c0_i32 = arith.constant 0 : i32
    %c0_i32_0 = arith.constant 0 : i32
    return %arg0, %c0_i32 : i32, i32
  }
}

</mosaic_0001>

<llo_original>
// kernel: transformer_layer.2
$region0: #{transformer_layer.2}
  #allocation0 [shape = 'u32[]', space=smem, size = 0x4, offset = 0x4, fixed_abs, tag = 'smem constant byte address 0x4 - core index']
  #allocation1 [shape = 'u32[144,128]{1,0:T(1,128)}', space=vmem, size = 0x12000, scoped, tag = 'internal scratch']
  %s0 = inlined_call_operand.vmem [shape: f32[8,32], index: 0, kind: input, shape index: {}]
  %s1 = inlined_call_operand.vmem [shape: bf16[32,32], index: 1, kind: input, shape index: {}]
  %s2 = inlined_call_operand.vmem [shape: f32[1,32], index: 2, kind: input, shape index: {}]
  %s3 = inlined_call_operand.vmem [shape: bf16[32,32], index: 3, kind: input, shape index: {}]
  %s4 = inlined_call_operand.vmem [shape: f32[1,32], index: 4, kind: input, shape index: {}]
  %s5 = inlined_call_operand.vmem [shape: bf16[8,32], index: 5, kind: output, shape index: {0}]
  %s6 = inlined_call_operand.vmem [shape: bf16[8,32], index: 6, kind: output, shape index: {1}]
  %7 = xla_tuple %s5, %s6
  %s8 = sld [smem:[#allocation0]]
  $region38: #{transformer_layer.2} parent=0
    _
  %s10 = ssub.s32 1, %s8
  %s11 = scalar_select 0, %s10, %s8
  // Predicated region
  $region2: #{transformer_layer.2} parent=0 // pred_check
    _
  $region3: #{transformer_layer.2} parent=0 // pred_check_branch
    %13 = sbr.rel (0) target = $region5
  $region4: #{transformer_layer.2} parent=0 // pred_region
    _
  $region5: #{transformer_layer.2} parent=0 // pred_fallthru
    _
  // Predicated region
  $region6: #{transformer_layer.2} parent=0 // pred_check
    _
  $region7: #{transformer_layer.2} parent=0 // pred_check_branch
    %15 = sbr.rel (0) target = $region9
  $region8: #{transformer_layer.2} parent=0 // pred_region
    _
  $region9: #{transformer_layer.2} parent=0 // pred_fallthru
    _
  // Predicated region
  $region10: #{transformer_layer.2} parent=0 // pred_check
    _
  $region11: #{transformer_layer.2} parent=0 // pred_check_branch
    %17 = sbr.rel (0) target = $region13
  $region12: #{transformer_layer.2} parent=0 // pred_region
    _
  $region13: #{transformer_layer.2} parent=0 // pred_fallthru
    _
  // Predicated region
  $region14: #{transformer_layer.2} parent=0 // pred_check
    _
  $region15: #{transformer_layer.2} parent=0 // pred_check_branch
    %19 = sbr.rel (0) target = $region17
  $region16: #{transformer_layer.2} parent=0 // pred_region
    _
  $region17: #{transformer_layer.2} parent=0 // pred_fallthru
    _
  // Predicated region
  $region18: #{transformer_layer.2} parent=0 // pred_check
    _
  $region19: #{transformer_layer.2} parent=0 // pred_check_branch
    %21 = sbr.rel (0) target = $region21
  $region20: #{transformer_layer.2} parent=0 // pred_region
    _
  $region21: #{transformer_layer.2} parent=0 // pred_fallthru
    _
  %v23 = vld [vmem:[%s0] sm:$0xff]
  %v24 = vpack.c.bf16 %v23, %v23
  %v25 = vld [vmem:[%s1] sm:$0xf]
  %v26 = vld [vmem:[%s1 + $0x4] sm:$0xf]
  %v27 = vld [vmem:[%s1 + $0x8] sm:$0xf]
  %v28 = vld [vmem:[%s1 + $0xc] sm:$0xf]
  %v29 = vld [vmem:[%s2] sm:$0x1]
  %v31 = vlaneseq
  %v32 = vshrl.u32 %v31, 7
  %v33 = vsub.s32 0, %v32
  %v34 = vrot.slane %v29, %v33
  %v40 = vunpack.c.l.b16 %v25
  %v41 = vunpack.c.l.b16 %v26
  %v42 = vunpack.c.l.b16 %v27
  %v43 = vunpack.c.l.b16 %v28
  %v44 = vpack.c.b16 %v41, %v40
  %v45 = vpack.c.b16 %v43, %v42
  %vm48 = vcmask 261120
  %v50 = vsel %vm48, %v24, 0
  %52 = vmatprep.subr.bf16.mxu0 0
  %53 = vmatpush1.bf16.msra.mxu0 %v44
  %54 = vmatprep.subr.bf16.mxu0 0
  %55 = vmatpush1.bf16.msra.mxu0 %v45
  %56 = vmatprep.subr.bf16.mxu0 0
  %57 = vmatpush1.bf16.msra.mxu0 0
  %58 = vmatprep.subr.bf16.mxu0 0
  %59 = vmatpush1.bf16.msra.mxu0 0
  %60 = vmatprep.subr.bf16.mxu0 0
  %61 = vmatpush1.bf16.msra.mxu0 0
  %62 = vmatprep.subr.bf16.mxu0 0
  %63 = vmatpush1.bf16.msra.mxu0 0
  %64 = vmatprep.subr.bf16.mxu0 0
  %65 = vmatpush1.bf16.msra.mxu0 0
  %66 = vmatprep.subr.bf16.mxu0 0
  %67 = vmatpush1.bf16.msra.mxu0 0
  %68 = vmatprep.subr.bf16.mxu0 0
  %69 = vmatpush1.bf16.msra.mxu0 0
  %70 = vmatprep.subr.bf16.mxu0 0
  %71 = vmatpush1.bf16.msra.mxu0 0
  %72 = vmatprep.subr.bf16.mxu0 0
  %73 = vmatpush1.bf16.msra.mxu0 0
  %74 = vmatprep.subr.bf16.mxu0 0
  %75 = vmatpush1.bf16.msra.mxu0 0
  %76 = vmatprep.subr.bf16.mxu0 0
  %77 = vmatpush1.bf16.msra.mxu0 0
  %78 = vmatprep.subr.bf16.mxu0 0
  %79 = vmatpush1.bf16.msra.mxu0 0
  %80 = vmatprep.subr.bf16.mxu0 0
  %81 = vmatpush1.bf16.msra.mxu0 0
  %82 = vmatprep.subr.bf16.mxu0 0
  %83 = vmatpush1.bf16.msra.mxu0 0
  %84 = vmatprep.mubr.bf16.mxu0 0
  %85 = vmatmul.mubr.bf16.gmra.mrb[0].mxu0 %v50
  %v86 = vpop.f32.mrb[0].mxu0
  %v87 = vadd.f32 %v34, %v86
  %v88 = vpop.f32.mrb[0].mxu0
  %v89 = vpop.f32.mrb[0].mxu0
  %v90 = vpop.f32.mrb[0].mxu0
  %91 = vdwg.mxu0
  %v92 = vld [vmem:[%s3] sm:$0xf]
  %v93 = vld [vmem:[%s3 + $0x4] sm:$0xf]
  %v94 = vld [vmem:[%s3 + $0x8] sm:$0xf]
  %v95 = vld [vmem:[%s3 + $0xc] sm:$0xf]
  %v96 = vld [vmem:[%s4] sm:$0x1]
  %v98 = vlaneseq
  %v99 = vshrl.u32 %v98, 7
  %v100 = vsub.s32 0, %v99
  %v101 = vrot.slane %v96, %v100
  %v107 = vunpack.c.l.b16 %v92
  %v108 = vunpack.c.l.b16 %v93
  %v109 = vunpack.c.l.b16 %v94
  %v110 = vunpack.c.l.b16 %v95
  %v111 = vpack.c.b16 %v108, %v107
  %v112 = vpack.c.b16 %v110, %v109
  %115 = vmatprep.subr.bf16.mxu0 0
  %116 = vmatpush1.bf16.msra.mxu0 %v111
  %117 = vmatprep.subr.bf16.mxu0 0
  %118 = vmatpush1.bf16.msra.mxu0 %v112
  %119 = vmatprep.subr.bf16.mxu0 0
  %120 = vmatpush1.bf16.msra.mxu0 0
  %121 = vmatprep.subr.bf16.mxu0 0
  %122 = vmatpush1.bf16.msra.mxu0 0
  %123 = vmatprep.subr.bf16.mxu0 0
  %124 = vmatpush1.bf16.msra.mxu0 0
  %125 = vmatprep.subr.bf16.mxu0 0
  %126 = vmatpush1.bf16.msra.mxu0 0
  %127 = vmatprep.subr.bf16.mxu0 0
  %128 = vmatpush1.bf16.msra.mxu0 0
  %129 = vmatprep.subr.bf16.mxu0 0
  %130 = vmatpush1.bf16.msra.mxu0 0
  %131 = vmatprep.subr.bf16.mxu0 0
  %132 = vmatpush1.bf16.msra.mxu0 0
  %133 = vmatprep.subr.bf16.mxu0 0
  %134 = vmatpush1.bf16.msra.mxu0 0
  %135 = vmatprep.subr.bf16.mxu0 0
  %136 = vmatpush1.bf16.msra.mxu0 0
  %137 = vmatprep.subr.bf16.mxu0 0
  %138 = vmatpush1.bf16.msra.mxu0 0
  %139 = vmatprep.subr.bf16.mxu0 0
  %140 = vmatpush1.bf16.msra.mxu0 0
  %141 = vmatprep.subr.bf16.mxu0 0
  %142 = vmatpush1.bf16.msra.mxu0 0
  %143 = vmatprep.subr.bf16.mxu0 0
  %144 = vmatpush1.bf16.msra.mxu0 0
  %145 = vmatprep.subr.bf16.mxu0 0
  %146 = vmatpush1.bf16.msra.mxu0 0
  %147 = vmatprep.mubr.bf16.mxu0 0
  %148 = vmatmul.mubr.bf16.gmra.mrb[0].mxu0 %v50
  %v149 = vpop.f32.mrb[0].mxu0
  %v150 = vadd.f32 %v101, %v149
  %v151 = vpop.f32.mrb[0].mxu0
  %v152 = vpop.f32.mrb[0].mxu0
  %v153 = vpop.f32.mrb[0].mxu0
  %154 = vdwg.mxu0
  %v155 = vpack.c.bf16 %v87, %v87
  %vm156 = vcmask 257024
  %157 = vst.msk [vmem:[%s5] sm:$0xf] %vm156, %v155
  %v158 = vpack.c.bf16 %v150, %v150
  %159 = vst.msk [vmem:[%s6] sm:$0xf] %vm156, %v158
  // Predicated region
  $region22: #{transformer_layer.2} parent=0 // pred_check
    _
  $region23: #{transformer_layer.2} parent=0 // pred_check_branch
    %161 = sbr.rel (0) target = $region25
  $region24: #{transformer_layer.2} parent=0 // pred_region
    _
  $region25: #{transformer_layer.2} parent=0 // pred_fallthru
    _
  // Predicated region
  $region26: #{transformer_layer.2} parent=0 // pred_check
    _
  $region27: #{transformer_layer.2} parent=0 // pred_check_branch
    %163 = sbr.rel (0) target = $region29
  $region28: #{transformer_layer.2} parent=0 // pred_region
    _
  $region29: #{transformer_layer.2} parent=0 // pred_fallthru
    _
  // Predicated region
  $region30: #{transformer_layer.2} parent=0 // pred_check
    _
  $region31: #{transformer_layer.2} parent=0 // pred_check_branch
    %165 = sbr.rel (0) target = $region33
  $region32: #{transformer_layer.2} parent=0 // pred_region
    _
  $region33: #{transformer_layer.2} parent=0 // pred_fallthru
    _
  // Predicated region
  $region34: #{transformer_layer.2} parent=0 // pred_check
    _
  $region35: #{transformer_layer.2} parent=0 // pred_check_branch
    %167 = sbr.rel (0) target = $region37
  $region36: #{transformer_layer.2} parent=0 // pred_region
    _
  $region37: #{transformer_layer.2} parent=0 // pred_fallthru
    _

// kernel: transformer_layer.3
$region0: #{transformer_layer.3}
  #allocation0 [shape = 'u32[]', space=smem, size = 0x4, offset = 0x4, fixed_abs, tag = 'smem constant byte address 0x4 - core index']
  #allocation1 [shape = 'u32[144,128]{1,0:T(1,128)}', space=vmem, size = 0x12000, scoped, tag = 'internal scratch']
  %s0 = inlined_call_operand.vmem [shape: f32[8,32], index: 0, kind: input, shape index: {}]
  %s1 = inlined_call_operand.vmem [shape: bf16[8,32], index: 1, kind: input, shape index: {}]
  %s2 = inlined_call_operand.vmem [shape: bf16[8,32], index: 2, kind: input, shape index: {}]
  %s3 = inlined_call_operand.vmem [shape: bf16[32,32], index: 3, kind: input, shape index: {}]
  %s4 = inlined_call_operand.vmem [shape: f32[1,32], index: 4, kind: input, shape index: {}]
  %s5 = inlined_call_operand.vmem [shape: bf16[32,32], index: 5, kind: input, shape index: {}]
  %s6 = inlined_call_operand.vmem [shape: f32[1,32], index: 6, kind: input, shape index: {}]
  %s7 = inlined_call_operand.vmem [shape: f32[1,32], index: 7, kind: input, shape index: {}]
  %s8 = inlined_call_operand.vmem [shape: f32[1,32], index: 8, kind: input, shape index: {}]
  %s9 = inlined_call_operand.vmem [shape: f32[1,32], index: 9, kind: input, shape index: {}]
  %s10 = inlined_call_operand.vmem [shape: f32[1,32], index: 10, kind: input, shape index: {}]
  %s11 = inlined_call_operand.vmem [shape: bf16[32,64], index: 11, kind: input, shape index: {}]
  %s12 = inlined_call_operand.vmem [shape: f32[1,64], index: 12, kind: input, shape index: {}]
  %s13 = inlined_call_operand.vmem [shape: bf16[64,32], index: 13, kind: input, shape index: {}]
  %s14 = inlined_call_operand.vmem [shape: f32[1,32], index: 14, kind: input, shape index: {}]
  %s15 = inlined_call_operand.hbm [shape: f32[8,32], index: 15, kind: output, shape index: {0}]
  %s16 = inlined_call_operand.hbm [shape: bf16[8,8], index: 16, kind: output, shape index: {1}]
  %17 = xla_tuple %s15, %s16
  %s18 = sld [smem:[#allocation0]]
  $region78: #{transformer_layer.3} parent=0
    _
  %s20 = ssub.s32 1, %s18
  %s21 = scalar_select 0, %s20, %s18
  $region1: #{transformer_layer.3} parent=0
    #allocation2 [shape = 'u8[4096]{0}', space=vmem, size = 0x1000, scoped, tag = 'output window, operand 0, single buffered']
    #allocation3 [shape = 's32[1]{0}', space=sflag, size = 0x4, scoped, tag = 'scoped memory for transformer_layer.3']
    #allocation4 [shape = 'u8[2048]{0}', space=vmem, size = 0x800, scoped, tag = 'output window, operand 1, single buffered']
    #allocation5 [shape = 's32[1]{0}', space=sflag, size = 0x4, scoped, tag = 'scoped memory for transformer_layer.3']
    %22 = vsyncpa [#allocation3], 0
    %23 = vsyncpa [#allocation5], 0
    // Predicated region
    $region2: #{transformer_layer.3} parent=1 // pred_check
      _
    $region3: #{transformer_layer.3} parent=1 // pred_check_branch
      %25 = sbr.rel (0) target = $region5
    $region4: #{transformer_layer.3} parent=1 // pred_region
      _
    $region5: #{transformer_layer.3} parent=1 // pred_fallthru
      _
    // Predicated region
    $region6: #{transformer_layer.3} parent=1 // pred_check
      _
    $region7: #{transformer_layer.3} parent=1 // pred_check_branch
      %27 = sbr.rel (0) target = $region9
    $region8: #{transformer_layer.3} parent=1 // pred_region
      _
    $region9: #{transformer_layer.3} parent=1 // pred_fallthru
      _
    // Predicated region
    $region10: #{transformer_layer.3} parent=1 // pred_check
      _
    $region11: #{transformer_layer.3} parent=1 // pred_check_branch
      %29 = sbr.rel (0) target = $region13
    $region12: #{transformer_layer.3} parent=1 // pred_region
      _
    $region13: #{transformer_layer.3} parent=1 // pred_fallthru
      _
    // Predicated region
    $region14: #{transformer_layer.3} parent=1 // pred_check
      _
    $region15: #{transformer_layer.3} parent=1 // pred_check_branch
      %31 = sbr.rel (0) target = $region17
    $region16: #{transformer_layer.3} parent=1 // pred_region
      _
    $region17: #{transformer_layer.3} parent=1 // pred_fallthru
      _
    // Predicated region
    $region18: #{transformer_layer.3} parent=1 // pred_check
      _
    $region19: #{transformer_layer.3} parent=1 // pred_check_branch
      %33 = sbr.rel (0) target = $region21
    $region20: #{transformer_layer.3} parent=1 // pred_region
      _
    $region21: #{transformer_layer.3} parent=1 // pred_fallthru
      _
    // Predicated region
    $region22: #{transformer_layer.3} parent=1 // pred_check
      _
    $region23: #{transformer_layer.3} parent=1 // pred_check_branch
      %35 = sbr.rel (0) target = $region25
    $region24: #{transformer_layer.3} parent=1 // pred_region
      _
    $region25: #{transformer_layer.3} parent=1 // pred_fallthru
      _
    // Predicated region
    $region26: #{transformer_layer.3} parent=1 // pred_check
      _
    $region27: #{transformer_layer.3} parent=1 // pred_check_branch
      %37 = sbr.rel (0) target = $region29
    $region28: #{transformer_layer.3} parent=1 // pred_region
      _
    $region29: #{transformer_layer.3} parent=1 // pred_fallthru
      _
    // Predicated region
    $region30: #{transformer_layer.3} parent=1 // pred_check
      _
    $region31: #{transformer_layer.3} parent=1 // pred_check_branch
      %39 = sbr.rel (0) target = $region33
    $region32: #{transformer_layer.3} parent=1 // pred_region
      _
    $region33: #{transformer_layer.3} parent=1 // pred_fallthru
      _
    // Predicated region
    $region34: #{transformer_layer.3} parent=1 // pred_check
      _
    $region35: #{transformer_layer.3} parent=1 // pred_check_branch
      %41 = sbr.rel (0) target = $region37
    $region36: #{transformer_layer.3} parent=1 // pred_region
      _
    $region37: #{transformer_layer.3} parent=1 // pred_fallthru
      _
    // Predicated region
    $region38: #{transformer_layer.3} parent=1 // pred_check
      _
    $region39: #{transformer_layer.3} parent=1 // pred_check_branch
      %43 = sbr.rel (0) target = $region41
    $region40: #{transformer_layer.3} parent=1 // pred_region
      _
    $region41: #{transformer_layer.3} parent=1 // pred_fallthru
      _
    // Predicated region
    $region42: #{transformer_layer.3} parent=1 // pred_check
      _
    $region43: #{transformer_layer.3} parent=1 // pred_check_branch
      %45 = sbr.rel (0) target = $region45
    $region44: #{transformer_layer.3} parent=1 // pred_region
      _
    $region45: #{transformer_layer.3} parent=1 // pred_fallthru
      _
    // Predicated region
    $region46: #{transformer_layer.3} parent=1 // pred_check
      _
    $region47: #{transformer_layer.3} parent=1 // pred_check_branch
      %47 = sbr.rel (0) target = $region49
    $region48: #{transformer_layer.3} parent=1 // pred_region
      _
    $region49: #{transformer_layer.3} parent=1 // pred_fallthru
      _
    // Predicated region
    $region50: #{transformer_layer.3} parent=1 // pred_check
      _
    $region51: #{transformer_layer.3} parent=1 // pred_check_branch
      %49 = sbr.rel (0) target = $region53
    $region52: #{transformer_layer.3} parent=1 // pred_region
      _
    $region53: #{transformer_layer.3} parent=1 // pred_fallthru
      _
    // Predicated region
    $region54: #{transformer_layer.3} parent=1 // pred_check
      _
    $region55: #{transformer_layer.3} parent=1 // pred_check_branch
      %51 = sbr.rel (0) target = $region57
    $region56: #{transformer_layer.3} parent=1 // pred_region
      _
    $region57: #{transformer_layer.3} parent=1 // pred_fallthru
      _
    // Predicated region
    $region58: #{transformer_layer.3} parent=1 // pred_check
      _
    $region59: #{transformer_layer.3} parent=1 // pred_check_branch
      %53 = sbr.rel (0) target = $region61
    $region60: #{transformer_layer.3} parent=1 // pred_region
      _
    $region61: #{transformer_layer.3} parent=1 // pred_fallthru
      _
    %v55 = vld [vmem:[%s0] sm:$0xff]
    %v56 = vpack.c.bf16 %v55, %v55
    %v57 = vld [vmem:[%s3] sm:$0xf]
    %v58 = vld [vmem:[%s3 + $0x4] sm:$0xf]
    %v59 = vld [vmem:[%s3 + $0x8] sm:$0xf]
    %v60 = vld [vmem:[%s3 + $0xc] sm:$0xf]
    %v61 = vld [vmem:[%s4] sm:$0x1]
    %v63 = vlaneseq
    %v64 = vshrl.u32 %v63, 7
    %v65 = vsub.s32 0, %v64
    %v66 = vrot.slane %v61, %v65
    %v72 = vunpack.c.l.b16 %v57
    %v73 = vunpack.c.l.b16 %v58
    %v74 = vunpack.c.l.b16 %v59
    %v75 = vunpack.c.l.b16 %v60
    %v76 = vpack.c.b16 %v73, %v72
    %v77 = vpack.c.b16 %v75, %v74
    %vm80 = vcmask 261120
    %v82 = vsel %vm80, %v56, 0
    %84 = vmatprep.subr.bf16.mxu0 0
    %85 = vmatpush1.bf16.msra.mxu0 %v76
    %86 = vmatprep.subr.bf16.mxu0 0
    %87 = vmatpush1.bf16.msra.mxu0 %v77
    %88 = vmatprep.subr.bf16.mxu0 0
    %89 = vmatpush1.bf16.msra.mxu0 0
    %90 = vmatprep.subr.bf16.mxu0 0
    %91 = vmatpush1.bf16.msra.mxu0 0
    %92 = vmatprep.subr.bf16.mxu0 0
    %93 = vmatpush1.bf16.msra.mxu0 0
    %94 = vmatprep.subr.bf16.mxu0 0
    %95 = vmatpush1.bf16.msra.mxu0 0
    %96 = vmatprep.subr.bf16.mxu0 0
    %97 = vmatpush1.bf16.msra.mxu0 0
    %98 = vmatprep.subr.bf16.mxu0 0
    %99 = vmatpush1.bf16.msra.mxu0 0
    %100 = vmatprep.subr.bf16.mxu0 0
    %101 = vmatpush1.bf16.msra.mxu0 0
    %102 = vmatprep.subr.bf16.mxu0 0
    %103 = vmatpush1.bf16.msra.mxu0 0
    %104 = vmatprep.subr.bf16.mxu0 0
    %105 = vmatpush1.bf16.msra.mxu0 0
    %106 = vmatprep.subr.bf16.mxu0 0
    %107 = vmatpush1.bf16.msra.mxu0 0
    %108 = vmatprep.subr.bf16.mxu0 0
    %109 = vmatpush1.bf16.msra.mxu0 0
    %110 = vmatprep.subr.bf16.mxu0 0
    %111 = vmatpush1.bf16.msra.mxu0 0
    %112 = vmatprep.subr.bf16.mxu0 0
    %113 = vmatpush1.bf16.msra.mxu0 0
    %114 = vmatprep.subr.bf16.mxu0 0
    %115 = vmatpush1.bf16.msra.mxu0 0
    %116 = vmatprep.mubr.bf16.mxu0 0
    %117 = vmatmul.mubr.bf16.gmra.mrb[0].mxu0 %v82
    %v118 = vpop.f32.mrb[0].mxu0
    %v119 = vadd.f32 %v66, %v118
    %v120 = vpop.f32.mrb[0].mxu0
    %v121 = vpop.f32.mrb[0].mxu0
    %v122 = vpop.f32.mrb[0].mxu0
    %123 = vdwg.mxu0
    %v124 = vmul.f32 %v119, 0.17677669
    %v125 = vpack.c.bf16 %v124, %v124
    %v126 = vld [vmem:[%s1] sm:$0xf]
    %v128 = vsel %vm80, %v125, 0
    %v131 = vsel %vm80, %v126, 0
    %133 = vmatprep.subr.bf16.mxu0 0
    %134 = vmatpush1.bf16.xpose.msra.mxu0 %v131
    %135 = vmatprep.subr.bf16.mxu0 0
    %136 = vmatpush1.bf16.xpose.msra.mxu0 0
    %137 = vmatprep.subr.bf16.mxu0 0
    %138 = vmatpush1.bf16.xpose.msra.mxu0 0
    %139 = vmatprep.subr.bf16.mxu0 0
    %140 = vmatpush1.bf16.xpose.msra.mxu0 0
    %141 = vmatprep.subr.bf16.mxu0 0
    %142 = vmatpush1.bf16.xpose.msra.mxu0 0
    %143 = vmatprep.subr.bf16.mxu0 0
    %144 = vmatpush1.bf16.xpose.msra.mxu0 0
    %145 = vmatprep.subr.bf16.mxu0 0
    %146 = vmatpush1.bf16.xpose.msra.mxu0 0
    %147 = vmatprep.subr.bf16.mxu0 0
    %148 = vmatpush1.bf16.xpose.msra.mxu0 0
    %149 = vmatprep.subr.bf16.mxu0 0
    %150 = vmatpush1.bf16.xpose.msra.mxu0 0
    %151 = vmatprep.subr.bf16.mxu0 0
    %152 = vmatpush1.bf16.xpose.msra.mxu0 0
    %153 = vmatprep.subr.bf16.mxu0 0
    %154 = vmatpush1.bf16.xpose.msra.mxu0 0
    %155 = vmatprep.subr.bf16.mxu0 0
    %156 = vmatpush1.bf16.xpose.msra.mxu0 0
    %157 = vmatprep.subr.bf16.mxu0 0
    %158 = vmatpush1.bf16.xpose.msra.mxu0 0
    %159 = vmatprep.subr.bf16.mxu0 0
    %160 = vmatpush1.bf16.xpose.msra.mxu0 0
    %161 = vmatprep.subr.bf16.mxu0 0
    %162 = vmatpush1.bf16.xpose.msra.mxu0 0
    %163 = vmatprep.subr.bf16.mxu0 0
    %164 = vmatpush1.bf16.xpose.msra.mxu0 0
    %165 = vmatprep.mubr.bf16.mxu0 0
    %166 = vmatmul.mubr.bf16.gmra.mrb[0].mxu0 %v128
    %v167 = vpop.f32.mrb[0].mxu0
    %v168 = vadd.f32 0.0, %v167
    %v169 = vpop.f32.mrb[0].mxu0
    %v170 = vpop.f32.mrb[0].mxu0
    %v171 = vpop.f32.mrb[0].mxu0
    %172 = vdwg.mxu0
    %vm173 = vcmask 64512
    %v174 = vsel %vm173, %v168, -inf
    %175 = vmax.xlane.f32.xlu0 %v174
    %v176 = vpop.xlane.xlu0 %175
    %v177 = vsub.f32 %v168, %v176
    %v178 = vmul.f32 %v177, 1.442695
    %v179 = vpow.pop %v178
    %v180 = vsel %vm173, %v179, 0.0
    %181 = vadd.xlane.f32.xlu0 %v180
    %v182 = vpop.xlane.xlu0 %181
    %v183 = vrcp.pop %v182
    %v184 = vmul.f32 %v179, %v183
    %v185 = vpack.c.bf16 %v184, %v184
    %vm186 = vcmask 60416
    %187 = vst.msk [vmem:[#allocation4] sm:$0xf] %vm186, %v185
    %v188 = vld [vmem:[%s2] sm:$0xf]
    %v190 = vsel %vm173, %v185, 0
    %vm192 = vcmask 1043456
    %v194 = vsel %vm192, %v188, 0
    %196 = vmatprep.subr.bf16.mxu0 0
    %197 = vmatpush1.bf16.msra.mxu0 %v194
    %198 = vmatprep.subr.bf16.mxu0 0
    %199 = vmatpush1.bf16.msra.mxu0 0
    %200 = vmatprep.subr.bf16.mxu0 0
    %201 = vmatpush1.bf16.msra.mxu0 0
    %202 = vmatprep.subr.bf16.mxu0 0
    %203 = vmatpush1.bf16.msra.mxu0 0
    %204 = vmatprep.subr.bf16.mxu0 0
    %205 = vmatpush1.bf16.msra.mxu0 0
    %206 = vmatprep.subr.bf16.mxu0 0
    %207 = vmatpush1.bf16.msra.mxu0 0
    %208 = vmatprep.subr.bf16.mxu0 0
    %209 = vmatpush1.bf16.msra.mxu0 0
    %210 = vmatprep.subr.bf16.mxu0 0
    %211 = vmatpush1.bf16.msra.mxu0 0
    %212 = vmatprep.subr.bf16.mxu0 0
    %213 = vmatpush1.bf16.msra.mxu0 0
    %214 = vmatprep.subr.bf16.mxu0 0
    %215 = vmatpush1.bf16.msra.mxu0 0
    %216 = vmatprep.subr.bf16.mxu0 0
    %217 = vmatpush1.bf16.msra.mxu0 0
    %218 = vmatprep.subr.bf16.mxu0 0
    %219 = vmatpush1.bf16.msra.mxu0 0
    %220 = vmatprep.subr.bf16.mxu0 0
    %221 = vmatpush1.bf16.msra.mxu0 0
    %222 = vmatprep.subr.bf16.mxu0 0
    %223 = vmatpush1.bf16.msra.mxu0 0
    %224 = vmatprep.subr.bf16.mxu0 0
    %225 = vmatpush1.bf16.msra.mxu0 0
    %226 = vmatprep.subr.bf16.mxu0 0
    %227 = vmatpush1.bf16.msra.mxu0 0
    %228 = vmatprep.mubr.bf16.mxu0 0
    %229 = vmatmul.mubr.bf16.gmra.mrb[0].mxu0 %v190
    %v230 = vpop.f32.mrb[0].mxu0
    %v231 = vadd.f32 0.0, %v230
    %v232 = vpop.f32.mrb[0].mxu0
    %v233 = vpop.f32.mrb[0].mxu0
    %v234 = vpop.f32.mrb[0].mxu0
    %235 = vdwg.mxu0
    %v236 = vpack.c.bf16 %v231, %v231
    %v237 = vld [vmem:[%s5] sm:$0xf]
    %v238 = vld [vmem:[%s5 + $0x4] sm:$0xf]
    %v239 = vld [vmem:[%s5 + $0x8] sm:$0xf]
    %v240 = vld [vmem:[%s5 + $0xc] sm:$0xf]
    %v241 = vld [vmem:[%s6] sm:$0x1]
    %v243 = vlaneseq
    %v244 = vshrl.u32 %v243, 7
    %v245 = vsub.s32 0, %v244
    %v246 = vrot.slane %v241, %v245
    %v252 = vunpack.c.l.b16 %v237
    %v253 = vunpack.c.l.b16 %v238
    %v254 = vunpack.c.l.b16 %v239
    %v255 = vunpack.c.l.b16 %v240
    %v256 = vpack.c.b16 %v253, %v252
    %v257 = vpack.c.b16 %v255, %v254
    %v261 = vsel %vm80, %v236, 0
    %263 = vmatprep.subr.bf16.mxu0 0
    %264 = vmatpush1.bf16.msra.mxu0 %v256
    %265 = vmatprep.subr.bf16.mxu0 0
    %266 = vmatpush1.bf16.msra.mxu0 %v257
    %267 = vmatprep.subr.bf16.mxu0 0
    %268 = vmatpush1.bf16.msra.mxu0 0
    %269 = vmatprep.subr.bf16.mxu0 0
    %270 = vmatpush1.bf16.msra.mxu0 0
    %271 = vmatprep.subr.bf16.mxu0 0
    %272 = vmatpush1.bf16.msra.mxu0 0
    %273 = vmatprep.subr.bf16.mxu0 0
    %274 = vmatpush1.bf16.msra.mxu0 0
    %275 = vmatprep.subr.bf16.mxu0 0
    %276 = vmatpush1.bf16.msra.mxu0 0
    %277 = vmatprep.subr.bf16.mxu0 0
    %278 = vmatpush1.bf16.msra.mxu0 0
    %279 = vmatprep.subr.bf16.mxu0 0
    %280 = vmatpush1.bf16.msra.mxu0 0
    %281 = vmatprep.subr.bf16.mxu0 0
    %282 = vmatpush1.bf16.msra.mxu0 0
    %283 = vmatprep.subr.bf16.mxu0 0
    %284 = vmatpush1.bf16.msra.mxu0 0
    %285 = vmatprep.subr.bf16.mxu0 0
    %286 = vmatpush1.bf16.msra.mxu0 0
    %287 = vmatprep.subr.bf16.mxu0 0
    %288 = vmatpush1.bf16.msra.mxu0 0
    %289 = vmatprep.subr.bf16.mxu0 0
    %290 = vmatpush1.bf16.msra.mxu0 0
    %291 = vmatprep.subr.bf16.mxu0 0
    %292 = vmatpush1.bf16.msra.mxu0 0
    %293 = vmatprep.subr.bf16.mxu0 0
    %294 = vmatpush1.bf16.msra.mxu0 0
    %295 = vmatprep.mubr.bf16.mxu0 0
    %296 = vmatmul.mubr.bf16.gmra.mrb[0].mxu0 %v261
    %v297 = vpop.f32.mrb[0].mxu0
    %v298 = vadd.f32 %v246, %v297
    %v299 = vpop.f32.mrb[0].mxu0
    %v300 = vpop.f32.mrb[0].mxu0
    %v301 = vpop.f32.mrb[0].mxu0
    %302 = vdwg.mxu0
    %v303 = vadd.f32 %v55, %v298
    %v304 = vsel %vm80, %v303, 0.0
    %305 = vadd.xlane.f32.xlu0 %v304
    %v306 = vpop.xlane.xlu0 %305
    %v307 = vmul.f32 %v306, 0.03125
    %v308 = vsub.f32 %v303, %v307
    %v309 = vmul.f32 %v308, %v308
    %v310 = vsel %vm80, %v309, 0.0
    %311 = vadd.xlane.f32.xlu0 %v310
    %v312 = vpop.xlane.xlu0 %311
    %v313 = vmul.f32 %v312, 0.03125
    %v314 = vadd.f32 %v313, 1e-05
    %v315 = vrsqrt.pop %v314
    %v316 = vmul.f32 %v308, %v315
    %v317 = vld [vmem:[%s7] sm:$0x1]
    %v319 = vlaneseq
    %v320 = vshrl.u32 %v319, 7
    %v321 = vsub.s32 0, %v320
    %v322 = vrot.slane %v317, %v321
    %v324 = vmul.f32 %v316, %v322
    %v325 = vld [vmem:[%s8] sm:$0x1]
    %v327 = vlaneseq
    %v328 = vshrl.u32 %v327, 7
    %v329 = vsub.s32 0, %v328
    %v330 = vrot.slane %v325, %v329
    %v332 = vadd.f32 %v324, %v330
    %v333 = vpack.c.bf16 %v332, %v332
    %v334 = vld [vmem:[%s11] sm:$0xf]
    %v335 = vld [vmem:[%s11 + $0x4] sm:$0xf]
    %v336 = vld [vmem:[%s11 + $0x8] sm:$0xf]
    %v337 = vld [vmem:[%s11 + $0xc] sm:$0xf]
    %v338 = vld [vmem:[%s12] sm:$0x1]
    %v340 = vlaneseq
    %v341 = vshrl.u32 %v340, 7
    %v342 = vsub.s32 0, %v341
    %v343 = vrot.slane %v338, %v342
    %v349 = vunpack.c.l.b16 %v334
    %v350 = vunpack.c.l.b16 %v335
    %v351 = vunpack.c.l.b16 %v336
    %v352 = vunpack.c.l.b16 %v337
    %v353 = vpack.c.b16 %v350, %v349
    %v354 = vpack.c.b16 %v352, %v351
    %v358 = vsel %vm80, %v333, 0
    %360 = vmatprep.subr.bf16.mxu0 0
    %361 = vmatpush1.bf16.msra.mxu0 %v353
    %362 = vmatprep.subr.bf16.mxu0 0
    %363 = vmatpush1.bf16.msra.mxu0 %v354
    %364 = vmatprep.subr.bf16.mxu0 0
    %365 = vmatpush1.bf16.msra.mxu0 0
    %366 = vmatprep.subr.bf16.mxu0 0
    %367 = vmatpush1.bf16.msra.mxu0 0
    %368 = vmatprep.subr.bf16.mxu0 0
    %369 = vmatpush1.bf16.msra.mxu0 0
    %370 = vmatprep.subr.bf16.mxu0 0
    %371 = vmatpush1.bf16.msra.mxu0 0
    %372 = vmatprep.subr.bf16.mxu0 0
    %373 = vmatpush1.bf16.msra.mxu0 0
    %374 = vmatprep.subr.bf16.mxu0 0
    %375 = vmatpush1.bf16.msra.mxu0 0
    %376 = vmatprep.subr.bf16.mxu0 0
    %377 = vmatpush1.bf16.msra.mxu0 0
    %378 = vmatprep.subr.bf16.mxu0 0
    %379 = vmatpush1.bf16.msra.mxu0 0
    %380 = vmatprep.subr.bf16.mxu0 0
    %381 = vmatpush1.bf16.msra.mxu0 0
    %382 = vmatprep.subr.bf16.mxu0 0
    %383 = vmatpush1.bf16.msra.mxu0 0
    %384 = vmatprep.subr.bf16.mxu0 0
    %385 = vmatpush1.bf16.msra.mxu0 0
    %386 = vmatprep.subr.bf16.mxu0 0
    %387 = vmatpush1.bf16.msra.mxu0 0
    %388 = vmatprep.subr.bf16.mxu0 0
    %389 = vmatpush1.bf16.msra.mxu0 0
    %390 = vmatprep.subr.bf16.mxu0 0
    %391 = vmatpush1.bf16.msra.mxu0 0
    %392 = vmatprep.mubr.bf16.mxu0 0
    %393 = vmatmul.mubr.bf16.gmra.mrb[0].mxu0 %v358
    %v394 = vpop.f32.mrb[0].mxu0
    %v395 = vadd.f32 %v343, %v394
    %v396 = vpop.f32.mrb[0].mxu0
    %v397 = vpop.f32.mrb[0].mxu0
    %v398 = vpop.f32.mrb[0].mxu0
    %399 = vdwg.mxu0
    %v400 = vmax.f32 %v395, 0.0
    %v401 = vpack.c.bf16 %v400, %v400
    %v402 = vld [vmem:[%s13] sm:$0xf]
    %v403 = vld [vmem:[%s13 + $0x4] sm:$0xf]
    %v404 = vld [vmem:[%s13 + $0x8] sm:$0xf]
    %v405 = vld [vmem:[%s13 + $0xc] sm:$0xf]
    %v406 = vld [vmem:[%s13 + $0x10] sm:$0xf]
    %v407 = vld [vmem:[%s13 + $0x14] sm:$0xf]
    %v408 = vld [vmem:[%s13 + $0x18] sm:$0xf]
    %v409 = vld [vmem:[%s13 + $0x1c] sm:$0xf]
    %v410 = vld [vmem:[%s14] sm:$0x1]
    %v412 = vlaneseq
    %v413 = vshrl.u32 %v412, 7
    %v414 = vsub.s32 0, %v413
    %v415 = vrot.slane %v410, %v414
    %v425 = vunpack.c.l.b16 %v402
    %v426 = vunpack.c.l.b16 %v403
    %v427 = vunpack.c.l.b16 %v404
    %v428 = vunpack.c.l.b16 %v405
    %v429 = vunpack.c.l.b16 %v406
    %v430 = vunpack.c.l.b16 %v407
    %v431 = vunpack.c.l.b16 %v408
    %v432 = vunpack.c.l.b16 %v409
    %v433 = vpack.c.b16 %v426, %v425
    %v434 = vpack.c.b16 %v428, %v427
    %v435 = vpack.c.b16 %v430, %v429
    %v436 = vpack.c.b16 %v432, %v431
    %vm441 = vcmask 523264
    %v443 = vsel %vm441, %v401, 0
    %445 = vmatprep.subr.bf16.mxu0 0
    %446 = vmatpush1.bf16.msra.mxu0 %v433
    %447 = vmatprep.subr.bf16.mxu0 0
    %448 = vmatpush1.bf16.msra.mxu0 %v434
    %449 = vmatprep.subr.bf16.mxu0 0
    %450 = vmatpush1.bf16.msra.mxu0 %v435
    %451 = vmatprep.subr.bf16.mxu0 0
    %452 = vmatpush1.bf16.msra.mxu0 %v436
    %453 = vmatprep.subr.bf16.mxu0 0
    %454 = vmatpush1.bf16.msra.mxu0 0
    %455 = vmatprep.subr.bf16.mxu0 0
    %456 = vmatpush1.bf16.msra.mxu0 0
    %457 = vmatprep.subr.bf16.mxu0 0
    %458 = vmatpush1.bf16.msra.mxu0 0
    %459 = vmatprep.subr.bf16.mxu0 0
    %460 = vmatpush1.bf16.msra.mxu0 0
    %461 = vmatprep.subr.bf16.mxu0 0
    %462 = vmatpush1.bf16.msra.mxu0 0
    %463 = vmatprep.subr.bf16.mxu0 0
    %464 = vmatpush1.bf16.msra.mxu0 0
    %465 = vmatprep.subr.bf16.mxu0 0
    %466 = vmatpush1.bf16.msra.mxu0 0
    %467 = vmatprep.subr.bf16.mxu0 0
    %468 = vmatpush1.bf16.msra.mxu0 0
    %469 = vmatprep.subr.bf16.mxu0 0
    %470 = vmatpush1.bf16.msra.mxu0 0
    %471 = vmatprep.subr.bf16.mxu0 0
    %472 = vmatpush1.bf16.msra.mxu0 0
    %473 = vmatprep.subr.bf16.mxu0 0
    %474 = vmatpush1.bf16.msra.mxu0 0
    %475 = vmatprep.subr.bf16.mxu0 0
    %476 = vmatpush1.bf16.msra.mxu0 0
    %477 = vmatprep.mubr.bf16.mxu0 0
    %478 = vmatmul.mubr.bf16.gmra.mrb[0].mxu0 %v443
    %v479 = vpop.f32.mrb[0].mxu0
    %v480 = vadd.f32 %v415, %v479
    %v481 = vpop.f32.mrb[0].mxu0
    %v482 = vpop.f32.mrb[0].mxu0
    %v483 = vpop.f32.mrb[0].mxu0
    %484 = vdwg.mxu0
    %v485 = vadd.f32 %v332, %v480
    %v486 = vsel %vm80, %v485, 0.0
    %487 = vadd.xlane.f32.xlu0 %v486
    %v488 = vpop.xlane.xlu0 %487
    %v489 = vmul.f32 %v488, 0.03125
    %v490 = vsub.f32 %v485, %v489
    %v491 = vmul.f32 %v490, %v490
    %v492 = vsel %vm80, %v491, 0.0
    %493 = vadd.xlane.f32.xlu0 %v492
    %v494 = vpop.xlane.xlu0 %493
    %v495 = vmul.f32 %v494, 0.03125
    %v496 = vadd.f32 %v495, 1e-05
    %v497 = vrsqrt.pop %v496
    %v498 = vmul.f32 %v490, %v497
    %v499 = vld [vmem:[%s9] sm:$0x1]
    %v501 = vlaneseq
    %v502 = vshrl.u32 %v501, 7
    %v503 = vsub.s32 0, %v502
    %v504 = vrot.slane %v499, %v503
    %v506 = vmul.f32 %v498, %v504
    %v507 = vld [vmem:[%s10] sm:$0x1]
    %v509 = vlaneseq
    %v510 = vshrl.u32 %v509, 7
    %v511 = vsub.s32 0, %v510
    %v512 = vrot.slane %v507, %v511
    %v514 = vadd.f32 %v506, %v512
    %515 = vst.msk [vmem:[#allocation2] sm:$0xff] %vm80, %v514
    // Predicated region
    $region62: #{transformer_layer.3} parent=1 // pred_check
      _
    $region63: #{transformer_layer.3} parent=1 // pred_check_branch
      %517 = sbr.rel (0) target = $region65
    $region64: #{transformer_layer.3} parent=1 // pred_region
      %s519 = ssub.s32 128, 128
      %520 = vsyncadd [#allocation3], %s519
      %s522 = sshll.u32 [#allocation2], 4
      %s523 = int_to_ptr.vmem [resolvable:$true] %s522
      %525 = dma.vmem_to_hbm [thread:$0]  %s523, 128, %s15, [#allocation3]
    $region65: #{transformer_layer.3} parent=1 // pred_fallthru
      _
    // Predicated region
    $region66: #{transformer_layer.3} parent=1 // pred_check
      _
    $region67: #{transformer_layer.3} parent=1 // pred_check_branch
      %527 = sbr.rel (0) target = $region69
    $region68: #{transformer_layer.3} parent=1 // pred_region
      %s529 = ssub.s32 64, 64
      %530 = vsyncadd [#allocation5], %s529
      %s532 = sshll.u32 [#allocation4], 4
      %s533 = int_to_ptr.vmem [resolvable:$true] %s532
      %535 = dma.vmem_to_hbm [thread:$0]  %s533, 64, %s16, [#allocation5]
    $region69: #{transformer_layer.3} parent=1 // pred_fallthru
      _
    // Predicated region
    $region70: #{transformer_layer.3} parent=1 // pred_check
      _
    $region71: #{transformer_layer.3} parent=1 // pred_check_branch
      %537 = sbr.rel (0) target = $region73
    $region72: #{transformer_layer.3} parent=1 // pred_region
      %538 = dma.done [#allocation3], 128
    $region73: #{transformer_layer.3} parent=1 // pred_fallthru
      _
    // Predicated region
    $region74: #{transformer_layer.3} parent=1 // pred_check
      _
    $region75: #{transformer_layer.3} parent=1 // pred_check_branch
      %540 = sbr.rel (0) target = $region77
    $region76: #{transformer_layer.3} parent=1 // pred_region
      %541 = dma.done [#allocation5], 64
    $region77: #{transformer_layer.3} parent=1 // pred_fallthru
      _
    %542 = vsyncpa [#allocation3], 1
    %543 = vsyncpa [#allocation5], 1

</llo_original>
